<compile_context>
chip_gen: v7x
topology: tpu7x:2x2x1
jax: 0.10.0
libtpu: 0.0.40
codegen_flags: <defaults>
</compile_context>

<pallas_src>
import functools
import math

import jax
import jax.numpy as jnp
from jax.experimental import pallas as pl
from jax.experimental.pallas import tpu as pltpu


def _softplus(x):
    # F.softplus(x, beta=1, threshold=20): x if x > 20 else log1p(exp(x))
    return jnp.where(x > 20.0, x, jnp.log1p(jnp.exp(jnp.minimum(x, 20.0))))


def _rup(x, m):
    return ((x + m - 1) // m) * m


def _pad2(a, rows, cols):
    return jnp.pad(a, ((0, rows - a.shape[0]), (0, cols - a.shape[1])))


def _tile_sizes(B, K, N):
    # Lane-dense output (tn multiple of 128), 16-aligned batch tile (bf16
    # sublane packing), big K tile -- lots of VMEM headroom with bf16 weights.
    tm = min(256, _rup(max(B, 1), 16))
    tk = min(1024, _rup(max(K, 1), 128))
    tn = min(512, _rup(max(N, 1), 128))
    # v7x has two TensorCores: if the ("parallel","parallel") i/j axes would
    # collapse to a single tile, split N so both cores get work.
    if -(-B // tm) == 1 and -(-N // tn) == 1:
        half = ((_rup(N, 128) // 2) // 128) * 128
        if half >= 128:
            tn = half
    return tm, tk, tn


def _row_tile(K, N):
    # Row tiling for the weight-only kernels: keep each (tkw, N) f32 block
    # small (~2 MiB) so they fit even v5e's default scoped VMEM.
    cap = max(8, (((512 * 1024) // max(N, 1)) // 8) * 8)
    tkw = min(_rup(K, 8), 256, cap)
    n_blk = -(-K // tkw)
    ragged = (n_blk * tkw != K)
    return tkw, n_blk, ragged


@functools.lru_cache(maxsize=1)
def _vmem_limit_bytes():
    # Per-generation VMEM budget (review: <=~48 MiB on v7x's 64 MiB VMEM).
    try:
        cap = pltpu.get_tpu_info().vmem_capacity_bytes
        return int(min(48 * 1024 * 1024, 0.7 * cap))
    except Exception:
        return 32 * 1024 * 1024


def _matmul_params():
    return pltpu.CompilerParams(
        dimension_semantics=("parallel", "parallel", "arbitrary"),
        vmem_limit_bytes=_vmem_limit_bytes())


def _weights_params():
    return pltpu.CompilerParams(
        dimension_semantics=("arbitrary",),
        vmem_limit_bytes=_vmem_limit_bytes())


# --------------------------- weight-only kernels -----------------------------
# Row-tiled over the (unpadded) weight matrices; the (1,1) KLD output block has
# a constant index so it stays resident and acts as the accumulator.

def _kld_det_kernel(wmu_ref, bmu_ref, kld_ref, *,
                    prior_sig, n_rows, tkw, n_elems, ragged):
    i = pl.program_id(0)
    w = wmu_ref[...]
    if ragged:  # static flag: mask the garbage rows of the last partial block
        rows = jax.lax.broadcasted_iota(jnp.int32, w.shape, 0) + i * tkw
        w = jnp.where(rows < n_rows, w, 0.0)
    ssq = jnp.sum(w * w, keepdims=True)

    @pl.when(i == 0)
    def _():
        b = bmu_ref[...]
        kld_ref[...] = jnp.sum(b * b, keepdims=True)

    kld_ref[...] += ssq

    @pl.when(i == pl.num_programs(0) - 1)
    def _():
        inv_sig2 = 1.0 / (prior_sig * prior_sig)
        log_const = math.log(prior_sig * math.sqrt(2.0 * math.pi))
        # constant folded in as a scalar after the reduction
        kld_ref[...] = 0.5 * inv_sig2 * kld_ref[...] + float(n_elems) * log_const


def _weights_sample_kernel(wmu_ref, wp_ref, bmu_ref, bp_ref, epsb_ref,
                           wvar_ref, bact_ref, kld_ref, *,
                           prior_sig, n_rows, tkw, ragged):
    i = pl.program_id(0)
    inv_sig2 = 1.0 / (prior_sig * prior_sig)
    kld_const = 2.0 * math.log(prior_sig) - 1.0

    wmu = wmu_ref[...]
    std_w = 1e-6 + _softplus(wp_ref[...])
    var_w = std_w * std_w
    # per-element contribution with the constant folded in elementwise: keeps
    # the f32 sum well conditioned; this kernel is off the batch critical path.
    c_w = (var_w + wmu * wmu) * inv_sig2 - jnp.log(var_w) + kld_const
    if ragged:
        rows = jax.lax.broadcasted_iota(jnp.int32, wmu.shape, 0) + i * tkw
        valid = rows < n_rows
        c_w = jnp.where(valid, c_w, 0.0)
        var_w = jnp.where(valid, var_w, 0.0)     # keep the bf16 stream finite
    wvar_ref[...] = var_w.astype(wvar_ref.dtype)  # bf16 stream for the matmul
    kld_w = jnp.sum(c_w, keepdims=True)

    @pl.when(i == 0)
    def _():
        bmu = bmu_ref[...]
        std_b = 1e-6 + _softplus(bp_ref[...])
        var_b = std_b * std_b
        bact_ref[...] = bmu + std_b * epsb_ref[...]   # sampled bias activation
        kld_ref[...] = jnp.sum(
            (var_b + bmu * bmu) * inv_sig2 - jnp.log(var_b) + kld_const,
            keepdims=True)

    kld_ref[...] += kld_w

    @pl.when(i == pl.num_programs(0) - 1)
    def _():
        kld_ref[...] = 0.5 * kld_ref[...]


# ----------------------------- tiled matmul kernels ---------------------------

def _linear_det_kernel(x_ref, wmu_ref, bmu_ref, out_ref, acc_ref):
    k = pl.program_id(2)

    @pl.when(k == 0)
    def _():
        acc_ref[...] = jnp.zeros_like(acc_ref)

    # bf16 x bf16 -> f32 accumulate (operands pre-cast in the wrapper)
    acc_ref[...] += jnp.dot(x_ref[...], wmu_ref[...],
                            preferred_element_type=jnp.float32)

    @pl.when(k == pl.num_programs(2) - 1)
    def _():
        out_ref[...] = (acc_ref[...] + bmu_ref[...]).astype(out_ref.dtype)


def _linear_sample_kernel(x_ref, xsq_ref, wmu_ref, wvar_ref, bact_ref, eps_ref,
                          out_ref, accmu_ref, accvar_ref):
    k = pl.program_id(2)

    @pl.when(k == 0)
    def _():
        accmu_ref[...] = jnp.zeros_like(accmu_ref)
        accvar_ref[...] = jnp.zeros_like(accvar_ref)

    accmu_ref[...] += jnp.dot(x_ref[...], wmu_ref[...],
                              preferred_element_type=jnp.float32)
    # variance matmul also single-pass bf16 on the MXU; the 1e-6 clamp below
    # bounds the rounding error before sqrt.
    accvar_ref[...] += jnp.dot(xsq_ref[...], wvar_ref[...],
                               preferred_element_type=jnp.float32)

    @pl.when(k == pl.num_programs(2) - 1)
    def _():
        act_std = jnp.sqrt(jnp.maximum(accvar_ref[...], 1e-6))
        out_ref[...] = (accmu_ref[...] + act_std * eps_ref[...]
                        + bact_ref[...]).astype(out_ref.dtype)


# --------------------------------- wrappers ----------------------------------

def bayes_linear_forward(x, w_mu, b_mu, prior_sig):
    """sample=False path.  Returns (output (B, n_out), kld scalar)."""
    B, K = x.shape
    N = w_mu.shape[1]
    tm, tk, tn = _tile_sizes(B, K, N)
    Mp, Kp, Np = _rup(B, tm), _rup(K, tk), _rup(N, tn)

    x32 = x.astype(jnp.float32)
    x_bf = _pad2(x32, Mp, Kp).astype(jnp.bfloat16)             # pad+cast, one pass
    wmu_bf = _pad2(w_mu.astype(jnp.float32), Kp, Np).astype(jnp.bfloat16)
    bmu_p = _pad2(b_mu.reshape(1, N).astype(jnp.float32), 1, Np)

    out = pl.pallas_call(
        _linear_det_kernel,
        out_shape=jax.ShapeDtypeStruct((Mp, Np), jnp.float32),
        grid_spec=pltpu.PrefetchScalarGridSpec(
            num_scalar_prefetch=0,
            grid=(Mp // tm, Np // tn, Kp // tk),
            in_specs=[
                pl.BlockSpec((tm, tk), lambda i, j, k: (i, k)),
                pl.BlockSpec((tk, tn), lambda i, j, k: (k, j)),
                pl.BlockSpec((1, tn), lambda i, j, k: (0, j)),
            ],
            out_specs=pl.BlockSpec((tm, tn), lambda i, j, k: (i, j)),
            scratch_shapes=[pltpu.VMEM((tm, tn), jnp.float32)],
        ),
        compiler_params=_matmul_params(),
    )(x_bf, wmu_bf, bmu_p)

    # KLD depends only on the weights: small row-tiled kernel (v5e VMEM-safe).
    tkw, n_blk, ragged = _row_tile(K, N)
    kld = pl.pallas_call(
        functools.partial(_kld_det_kernel, prior_sig=float(prior_sig),
                          n_rows=K, tkw=tkw, n_elems=K * N + N, ragged=ragged),
        out_shape=jax.ShapeDtypeStruct((1, 1), jnp.float32),
        grid_spec=pltpu.PrefetchScalarGridSpec(
            num_scalar_prefetch=0,
            grid=(n_blk,),
            in_specs=[pl.BlockSpec((tkw, N), lambda i: (i, 0)),
                      pl.BlockSpec((1, N), lambda i: (0, 0))],
            out_specs=pl.BlockSpec((1, 1), lambda i: (0, 0)),
        ),
        compiler_params=_weights_params(),
    )(w_mu.astype(jnp.float32), b_mu.reshape(1, N).astype(jnp.float32))

    return out[:B, :N], kld[0, 0]


def bayes_linear_forward_sample(x, w_mu, w_p, b_mu, b_p, prior_sig,
                                key=None, eps_w=None, eps_b=None):
    """sample=True path (local reparameterization).  Returns (output, kld)."""
    B, K = x.shape
    N = w_mu.shape[1]
    if eps_w is None or eps_b is None:
        if key is None:
            key = jax.random.PRNGKey(0)
        k_w, k_b = jax.random.split(key)
        if eps_w is None:
            eps_w = jax.random.normal(k_w, (B, N), dtype=jnp.float32)
        if eps_b is None:
            eps_b = jax.random.normal(k_b, (N,), dtype=jnp.float32)

    tm, tk, tn = _tile_sizes(B, K, N)
    Mp, Kp, Np = _rup(B, tm), _rup(K, tk), _rup(N, tn)

    # ---- weight-only pass: softplus, var_w (bf16), sampled bias, KLD ----
    tkw, n_blk, ragged = _row_tile(K, N)
    w_var, b_act, kld = pl.pallas_call(
        functools.partial(_weights_sample_kernel, prior_sig=float(prior_sig),
                          n_rows=K, tkw=tkw, ragged=ragged),
        out_shape=(
            jax.ShapeDtypeStruct((K, N), jnp.bfloat16),   # var_w stream (bf16)
            jax.ShapeDtypeStruct((1, N), jnp.float32),    # sampled bias act
            jax.ShapeDtypeStruct((1, 1), jnp.float32),    # KLD
        ),
        grid_spec=pltpu.PrefetchScalarGridSpec(
            num_scalar_prefetch=0,
            grid=(n_blk,),
            in_specs=[
                pl.BlockSpec((tkw, N), lambda i: (i, 0)),   # W_mu
                pl.BlockSpec((tkw, N), lambda i: (i, 0)),   # W_p
                pl.BlockSpec((1, N), lambda i: (0, 0)),     # b_mu
                pl.BlockSpec((1, N), lambda i: (0, 0)),     # b_p
                pl.BlockSpec((1, N), lambda i: (0, 0)),     # eps_b
            ],
            out_specs=(
                pl.BlockSpec((tkw, N), lambda i: (i, 0)),
                pl.BlockSpec((1, N), lambda i: (0, 0)),
                pl.BlockSpec((1, 1), lambda i: (0, 0)),
            ),
        ),
        compiler_params=_weights_params(),
    )(w_mu.astype(jnp.float32), w_p.astype(jnp.float32),
      b_mu.reshape(1, N).astype(jnp.float32),
      b_p.reshape(1, N).astype(jnp.float32),
      eps_b.reshape(1, N).astype(jnp.float32))

    # ---- tiled mean + variance matmuls (shared grid, bf16 streams) ----
    x32 = x.astype(jnp.float32)
    x_bf = _pad2(x32, Mp, Kp).astype(jnp.bfloat16)
    xsq_bf = _pad2(x32 * x32, Mp, Kp).astype(jnp.bfloat16)    # x^2 computed once
    wmu_bf = _pad2(w_mu.astype(jnp.float32), Kp, Np).astype(jnp.bfloat16)
    wvar_bf = _pad2(w_var, Kp, Np)                            # already bf16
    bact_p = _pad2(b_act, 1, Np)
    eps_p = _pad2(eps_w.astype(jnp.float32), Mp, Np)

    out = pl.pallas_call(
        _linear_sample_kernel,
        out_shape=jax.ShapeDtypeStruct((Mp, Np), jnp.float32),
        grid_spec=pltpu.PrefetchScalarGridSpec(
            num_scalar_prefetch=0,
            grid=(Mp // tm, Np // tn, Kp // tk),
            in_specs=[
                pl.BlockSpec((tm, tk), lambda i, j, k: (i, k)),   # x (bf16)
                pl.BlockSpec((tm, tk), lambda i, j, k: (i, k)),   # x^2 (bf16)
                pl.BlockSpec((tk, tn), lambda i, j, k: (k, j)),   # W_mu (bf16)
                pl.BlockSpec((tk, tn), lambda i, j, k: (k, j)),   # var_w (bf16)
                pl.BlockSpec((1, tn), lambda i, j, k: (0, j)),    # sampled bias
                pl.BlockSpec((tm, tn), lambda i, j, k: (i, j)),   # eps_W
            ],
            out_specs=pl.BlockSpec((tm, tn), lambda i, j, k: (i, j)),
            scratch_shapes=[pltpu.VMEM((tm, tn), jnp.float32),
                            pltpu.VMEM((tm, tn), jnp.float32)],
        ),
        compiler_params=_matmul_params(),
    )(x_bf, xsq_bf, wmu_bf, wvar_bf, bact_p, eps_p)

    return out[:B, :N], kld[0, 0]


# ------------------------------------ demo ------------------------------------

if __name__ == "__main__":
    n_in, n_out, batch = 32, 64, 8
    prior_sig = 0.1

    key = jax.random.PRNGKey(0)
    k_wmu, k_bmu, k_wp, k_bp, k_x, k_ew, k_eb = jax.random.split(key, 7)

    # __init__: uniform_(-0.02, 0.02); init_rho(p_min=-3, p_max=-2)
    w_mu = jax.random.uniform(k_wmu, (n_in, n_out), jnp.float32, -0.02, 0.02)
    b_mu = jax.random.uniform(k_bmu, (n_out,), jnp.float32, -0.02, 0.02)
    w_p = jax.random.uniform(k_wp, (n_in, n_out), jnp.float32, -3.0, -2.0)
    b_p = jax.random.uniform(k_bp, (n_out,), jnp.float32, -3.0, -2.0)
    x = jax.random.normal(k_x, (batch, n_in), dtype=jnp.float32)
    eps_w = jax.random.normal(k_ew, (batch, n_out), dtype=jnp.float32)
    eps_b = jax.random.normal(k_eb, (n_out,), dtype=jnp.float32)

    # ---------------- sample=False ----------------
    out_det, kld_det = bayes_linear_forward(x, w_mu, b_mu, prior_sig)
    out_det = jax.block_until_ready(out_det)
    kld_det = jax.block_until_ready(kld_det)

    # reference mimics the kernel's bf16 MXU operands (f32 accumulation)
    ref_out = jnp.dot(x.astype(jnp.bfloat16), w_mu.astype(jnp.bfloat16),
                      preferred_element_type=jnp.float32) + b_mu[None, :]
    log_const = math.log(prior_sig * math.sqrt(2.0 * math.pi))
    ref_kld = (jnp.sum(0.5 * (w_mu / prior_sig) ** 2 + log_const)
               + jnp.sum(0.5 * (b_mu / prior_sig) ** 2 + log_const))
    assert out_det.shape == (batch, n_out)
    assert jnp.allclose(out_det, ref_out, atol=2e-3, rtol=2e-3), "det output mismatch"
    assert jnp.allclose(kld_det, ref_kld, atol=1e-2, rtol=1e-3), "det KLD mismatch"

    # ---------------- sample=True ----------------
    out_s, kld_s = bayes_linear_forward_sample(
        x, w_mu, w_p, b_mu, b_p, prior_sig, eps_w=eps_w, eps_b=eps_b)
    out_s = jax.block_until_ready(out_s)
    kld_s = jax.block_until_ready(kld_s)

    std_w = 1e-6 + _softplus(w_p)
    var_w = std_w * std_w
    std_b = 1e-6 + _softplus(b_p)
    act_mu = jnp.dot(x.astype(jnp.bfloat16), w_mu.astype(jnp.bfloat16),
                     preferred_element_type=jnp.float32)
    act_var = jnp.dot((x * x).astype(jnp.bfloat16), var_w.astype(jnp.bfloat16),
                      preferred_element_type=jnp.float32)
    ref_s = (act_mu + jnp.sqrt(jnp.maximum(act_var, 1e-6)) * eps_w
             + (b_mu + std_b * eps_b)[None, :])
    ref_kld_s = (0.5 * jnp.sum(2 * jnp.log(prior_sig / std_w) - 1
                               + (std_w / prior_sig) ** 2
                               + (w_mu / prior_sig) ** 2)
                 + 0.5 * jnp.sum(2 * jnp.log(prior_sig / std_b) - 1
                                 + (std_b / prior_sig) ** 2
                                 + (b_mu / prior_sig) ** 2))
    assert out_s.shape == (batch, n_out)
    assert bool(jnp.all(jnp.isfinite(out_s)))
    assert jnp.allclose(out_s, ref_s, atol=2e-2, rtol=2e-2), "sample output mismatch"
    assert jnp.allclose(kld_s, ref_kld_s, atol=5e-2, rtol=2e-3), "sample KLD mismatch"

    print("KERNEL_OK")
</pallas_src>

<mosaic_0001>
module attributes {stable_mosaic.version = 11 : i64} {
  func.func @_linear_det_kernel(%arg0: i32, %arg1: i32, %arg2: i32, %arg3: memref<16x128xbf16, #tpu.memory_space<vmem>>, %arg4: memref<128x128xbf16, #tpu.memory_space<vmem>>, %arg5: memref<1x128xf32, #tpu.memory_space<vmem>>, %arg6: memref<16x128xf32, #tpu.memory_space<vmem>>, %arg7: memref<16x128xf32, #tpu.memory_space<vmem>>) attributes {dimension_semantics = [#tpu.dimension_semantics<parallel>, #tpu.dimension_semantics<parallel>, #tpu.dimension_semantics<arbitrary>], iteration_bounds = array<i64: 1, 1, 1>, scalar_prefetch = 0 : i64, scratch_operands = 1 : i64, tpu.core_type = #tpu.core_type<tc>, window_params = [{transform_indices = @transform_0, window_bounds = array<i64: 16, 128>}, {transform_indices = @transform_1, window_bounds = array<i64: 128, 128>}, {transform_indices = @transform_2, window_bounds = array<i64: 1, 128>}, {transform_indices = @transform_3, window_bounds = array<i64: 16, 128>}]} {
    %c0_i32 = arith.constant 0 : i32
    %0 = arith.cmpi eq, %arg2, %c0_i32 : i32
    %1 = arith.extui %0 : i1 to i32
    %c0_i32_0 = arith.constant 0 : i32
    %2 = arith.cmpi ne, %1, %c0_i32_0 : i32
    scf.if %2 {
      %cst_10 = arith.constant 0.000000e+00 : f32
      %12 = vector.broadcast %cst_10 : f32 to vector<16x128xf32>
      %c0_11 = arith.constant 0 : index
      %c0_12 = arith.constant 0 : index
      %13 = vector.load %arg7[%c0_11, %c0_12] : memref<16x128xf32, #tpu.memory_space<vmem>>, vector<16x128xf32>
      tpu.vector_store %arg7[%c0_11, %c0_12], %12 {strides = array<i32>} : memref<16x128xf32, #tpu.memory_space<vmem>>, vector<16x128xf32>,
    } else {
    }
    %c0 = arith.constant 0 : index
    %c0_1 = arith.constant 0 : index
    %3 = vector.load %arg7[%c0, %c0_1] : memref<16x128xf32, #tpu.memory_space<vmem>>, vector<16x128xf32>
    %c0_2 = arith.constant 0 : index
    %c0_3 = arith.constant 0 : index
    %4 = vector.load %arg3[%c0_2, %c0_3] : memref<16x128xbf16, #tpu.memory_space<vmem>>, vector<16x128xbf16>
    %c0_4 = arith.constant 0 : index
    %c0_5 = arith.constant 0 : index
    %5 = vector.load %arg4[%c0_4, %c0_5] : memref<128x128xbf16, #tpu.memory_space<vmem>>, vector<128x128xbf16>
    %cst = arith.constant dense<0.000000e+00> : vector<16x128xf32>
    %6 = tpu.matmul %4, %5, %cst {dimension_numbers = #tpu.dot_dimension_numbers<[1], [0], [0], [1], [0, 0, 1, 1], [], []>} : vector<16x128xbf16>, vector<128x128xbf16>, vector<16x128xf32> -> vector<16x128xf32>
    %7 = arith.addf %3, %6 : vector<16x128xf32>
    %c0_6 = arith.constant 0 : index
    %c0_7 = arith.constant 0 : index
    %8 = vector.load %arg7[%c0_6, %c0_7] : memref<16x128xf32, #tpu.memory_space<vmem>>, vector<16x128xf32>
    tpu.vector_store %arg7[%c0_6, %c0_7], %7 {strides = array<i32>} : memref<16x128xf32, #tpu.memory_space<vmem>>, vector<16x128xf32>,
    %c0_i32_8 = arith.constant 0 : i32
    %9 = arith.cmpi eq, %arg2, %c0_i32_8 : i32
    %10 = arith.extui %9 : i1 to i32
    %c0_i32_9 = arith.constant 0 : i32
    %11 = arith.cmpi ne, %10, %c0_i32_9 : i32
    scf.if %11 {
      %c0_10 = arith.constant 0 : index
      %c0_11 = arith.constant 0 : index
      %12 = vector.load %arg7[%c0_10, %c0_11] : memref<16x128xf32, #tpu.memory_space<vmem>>, vector<16x128xf32>
      %c0_12 = arith.constant 0 : index
      %c0_13 = arith.constant 0 : index
      %13 = vector.load %arg5[%c0_12, %c0_13] : memref<1x128xf32, #tpu.memory_space<vmem>>, vector<1x128xf32>
      %14 = vector.broadcast %13 : vector<1x128xf32> to vector<16x128xf32>
      %15 = arith.addf %12, %14 : vector<16x128xf32>
      %c0_14 = arith.constant 0 : index
      %c0_15 = arith.constant 0 : index
      %16 = vector.load %arg6[%c0_14, %c0_15] : memref<16x128xf32, #tpu.memory_space<vmem>>, vector<16x128xf32>
      tpu.vector_store %arg6[%c0_14, %c0_15], %15 {strides = array<i32>} : memref<16x128xf32, #tpu.memory_space<vmem>>, vector<16x128xf32>,
    } else {
    }
    return
  }
  func.func @transform_0(%arg0: i32, %arg1: i32, %arg2: i32) -> (i32, i32) {
    %c0_i32 = arith.constant 0 : i32
    return %arg0, %arg2 : i32, i32
  }
  func.func @transform_1(%arg0: i32, %arg1: i32, %arg2: i32) -> (i32, i32) {
    %c0_i32 = arith.constant 0 : i32
    return %arg2, %arg1 : i32, i32
  }
  func.func @transform_2(%arg0: i32, %arg1: i32, %arg2: i32) -> (i32, i32) {
    %c0_i32 = arith.constant 0 : i32
    %c0_i32_0 = arith.constant 0 : i32
    return %c0_i32, %arg1 : i32, i32
  }
  func.func @transform_3(%arg0: i32, %arg1: i32, %arg2: i32) -> (i32, i32) {
    %c0_i32 = arith.constant 0 : i32
    return %arg0, %arg1 : i32, i32
  }
}

</mosaic_0001>

<llo_original>
// kernel: tpu_custom_call.1
$region0: #{tpu_custom_call.1}
  #allocation0 [shape = 'u32[]', space=smem, size = 0x4, offset = 0x4, fixed_abs, tag = 'smem constant byte address 0x4 - core index']
  #allocation1 [shape = 'u32[144,128]{1,0:T(1,128)}', space=vmem, size = 0x12000, scoped, tag = 'internal scratch']
  #allocation2 [shape = 'f32[16,128]{1,0:T(8,128)}', space=vmem, size = 0x2000, scoped, tag = 'scratch operand']
  %s0 = inlined_call_operand.hbm [shape: bf16[16,128], index: 0, kind: input, shape index: {}]
  %s1 = inlined_call_operand.hbm [shape: bf16[128,128], index: 1, kind: input, shape index: {}]
  %s2 = inlined_call_operand.vmem [shape: f32[1,128], index: 2, kind: input, shape index: {}]
  %s3 = inlined_call_operand.hbm [shape: f32[16,128], index: 3, kind: output, shape index: {}]
  %s4 = sld [smem:[#allocation0]]
  $region38: #{tpu_custom_call.1} parent=0
    _
  %s6 = ssub.s32 1, %s4
  %s7 = scalar_select 0, %s6, %s4
  $region1: #{tpu_custom_call.1} parent=0
    #allocation3 [shape = 'u8[4096]{0}', space=vmem, size = 0x1000, scoped, tag = 'input window, operand 0, single buffered']
    #allocation4 [shape = 's32[1]{0}', space=sflag, size = 0x4, scoped, tag = 'scoped memory for tpu_custom_call.1']
    #allocation5 [shape = 's32[1]{0}', space=sflag, size = 0x4, scoped, tag = 'scoped memory for tpu_custom_call.1']
    #allocation6 [shape = 'u8[32768]{0}', space=vmem, size = 0x8000, scoped, tag = 'input window, operand 1, single buffered']
    #allocation7 [shape = 's32[1]{0}', space=sflag, size = 0x4, scoped, tag = 'scoped memory for tpu_custom_call.1']
    #allocation8 [shape = 'u8[8192]{0}', space=vmem, size = 0x2000, scoped, tag = 'output window, operand 0, single buffered']
    %8 = vsyncpa [#allocation4], 0
    %9 = vsyncpa [#allocation7], 0
    %10 = vsyncpa [#allocation5], 0
    // Predicated region
    $region2: #{tpu_custom_call.1} parent=1 // pred_check
      _
    $region3: #{tpu_custom_call.1} parent=1 // pred_check_branch
      %12 = sbr.rel (0) target = $region5
    $region4: #{tpu_custom_call.1} parent=1 // pred_region
      %s14 = ssub.s32 128, 128
      %15 = vsyncadd [#allocation4], %s14
      %s16 = sshll.u32 [#allocation3], 4
      %s17 = int_to_ptr.vmem [resolvable:$true] %s16
      %22 = dma.hbm_to_vmem [thread:$0]  %s0, 128, %s17, [#allocation4], 64, 64, 4
    $region5: #{tpu_custom_call.1} parent=1 // pred_fallthru
      _
    // Predicated region
    $region6: #{tpu_custom_call.1} parent=1 // pred_check
      _
    $region7: #{tpu_custom_call.1} parent=1 // pred_check_branch
      %24 = sbr.rel (0) target = $region9
    $region8: #{tpu_custom_call.1} parent=1 // pred_region
      %s26 = ssub.s32 1024, 1024
      %27 = vsyncadd [#allocation7], %s26
      %s28 = sshll.u32 [#allocation6], 4
      %s29 = int_to_ptr.vmem [resolvable:$true] %s28
      %34 = dma.hbm_to_vmem [thread:$0]  %s1, 1024, %s29, [#allocation7], 64, 64, 4
    $region9: #{tpu_custom_call.1} parent=1 // pred_fallthru
      _
    // Predicated region
    $region10: #{tpu_custom_call.1} parent=1 // pred_check
      _
    $region11: #{tpu_custom_call.1} parent=1 // pred_check_branch
      %36 = sbr.rel (0) target = $region13
    $region12: #{tpu_custom_call.1} parent=1 // pred_region
      _
    $region13: #{tpu_custom_call.1} parent=1 // pred_fallthru
      _
    // Predicated region
    $region14: #{tpu_custom_call.1} parent=1 // pred_check
      _
    $region15: #{tpu_custom_call.1} parent=1 // pred_check_branch
      %38 = sbr.rel (0) target = $region17
    $region16: #{tpu_custom_call.1} parent=1 // pred_region
      %39 = dma.done [#allocation4], 128
    $region17: #{tpu_custom_call.1} parent=1 // pred_fallthru
      _
    // Predicated region
    $region18: #{tpu_custom_call.1} parent=1 // pred_check
      _
    $region19: #{tpu_custom_call.1} parent=1 // pred_check_branch
      %41 = sbr.rel (0) target = $region21
    $region20: #{tpu_custom_call.1} parent=1 // pred_region
      %42 = dma.done [#allocation7], 1024
    $region21: #{tpu_custom_call.1} parent=1 // pred_fallthru
      _
    %p44 = scmp.eq.s32.totalorder 0, 0
    // Predicated region
    $region22: #{tpu_custom_call.1} parent=1 // pred_check
      %p45 = pneg %p44
    $region23: #{tpu_custom_call.1} parent=1 // pred_check_branch
      %47 = sbr.rel (%p45) target = $region25
    $region24: #{tpu_custom_call.1} parent=1 // pred_region
      %48 = vst [vmem:[#allocation2] sm:$0xff] 0.0
      %49 = vst [vmem:[#allocation2 + $0x8] sm:$0xff] 0.0
    $region25: #{tpu_custom_call.1} parent=1 // pred_fallthru
      _
    %v50 = vld [vmem:[#allocation2] sm:$0xff]
    %v51 = vld [vmem:[#allocation2 + $0x8] sm:$0xff]
    %v52 = vld [vmem:[#allocation3] sm:$0xf]
    %v53 = vld [vmem:[#allocation3 + $0x4] sm:$0xf]
    %v54 = vld [vmem:[#allocation6] sm:$0xf]
    %v55 = vld [vmem:[#allocation6 + $0x4] sm:$0xf]
    %v56 = vld [vmem:[#allocation6 + $0x8] sm:$0xf]
    %v57 = vld [vmem:[#allocation6 + $0xc] sm:$0xf]
    %v58 = vld [vmem:[#allocation6 + $0x10] sm:$0xf]
    %v59 = vld [vmem:[#allocation6 + $0x14] sm:$0xf]
    %v60 = vld [vmem:[#allocation6 + $0x18] sm:$0xf]
    %v61 = vld [vmem:[#allocation6 + $0x1c] sm:$0xf]
    %v62 = vld [vmem:[#allocation6 + $0x20] sm:$0xf]
    %v63 = vld [vmem:[#allocation6 + $0x24] sm:$0xf]
    %v64 = vld [vmem:[#allocation6 + $0x28] sm:$0xf]
    %v65 = vld [vmem:[#allocation6 + $0x2c] sm:$0xf]
    %v66 = vld [vmem:[#allocation6 + $0x30] sm:$0xf]
    %v67 = vld [vmem:[#allocation6 + $0x34] sm:$0xf]
    %v68 = vld [vmem:[#allocation6 + $0x38] sm:$0xf]
    %v69 = vld [vmem:[#allocation6 + $0x3c] sm:$0xf]
    %v72 = vunpack.c.l.b16 %v52
    %v73 = vunpack.c.l.b16 %v53
    %v74 = vpack.c.b16 %v73, %v72
    %v92 = vunpack.c.l.b16 %v54
    %v93 = vunpack.c.l.b16 %v55
    %v94 = vunpack.c.l.b16 %v56
    %v95 = vunpack.c.l.b16 %v57
    %v96 = vunpack.c.l.b16 %v58
    %v97 = vunpack.c.l.b16 %v59
    %v98 = vunpack.c.l.b16 %v60
    %v99 = vunpack.c.l.b16 %v61
    %v100 = vunpack.c.l.b16 %v62
    %v101 = vunpack.c.l.b16 %v63
    %v102 = vunpack.c.l.b16 %v64
    %v103 = vunpack.c.l.b16 %v65
    %v104 = vunpack.c.l.b16 %v66
    %v105 = vunpack.c.l.b16 %v67
    %v106 = vunpack.c.l.b16 %v68
    %v107 = vunpack.c.l.b16 %v69
    %v108 = vpack.c.b16 %v93, %v92
    %v109 = vpack.c.b16 %v95, %v94
    %v110 = vpack.c.b16 %v97, %v96
    %v111 = vpack.c.b16 %v99, %v98
    %v112 = vpack.c.b16 %v101, %v100
    %v113 = vpack.c.b16 %v103, %v102
    %v114 = vpack.c.b16 %v105, %v104
    %v115 = vpack.c.b16 %v107, %v106
    %124 = vmatprep.subr.bf16.mxu0 0
    %125 = vmatpush1.bf16.msra.mxu0 %v108
    %126 = vmatprep.subr.bf16.mxu0 0
    %127 = vmatpush1.bf16.msra.mxu0 %v109
    %128 = vmatprep.subr.bf16.mxu0 0
    %129 = vmatpush1.bf16.msra.mxu0 %v110
    %130 = vmatprep.subr.bf16.mxu0 0
    %131 = vmatpush1.bf16.msra.mxu0 %v111
    %132 = vmatprep.subr.bf16.mxu0 0
    %133 = vmatpush1.bf16.msra.mxu0 %v112
    %134 = vmatprep.subr.bf16.mxu0 0
    %135 = vmatpush1.bf16.msra.mxu0 %v113
    %136 = vmatprep.subr.bf16.mxu0 0
    %137 = vmatpush1.bf16.msra.mxu0 %v114
    %138 = vmatprep.subr.bf16.mxu0 0
    %139 = vmatpush1.bf16.msra.mxu0 %v115
    %140 = vmatprep.subr.bf16.mxu0 0
    %141 = vmatpush1.bf16.msra.mxu0 0
    %142 = vmatprep.subr.bf16.mxu0 0
    %143 = vmatpush1.bf16.msra.mxu0 0
    %144 = vmatprep.subr.bf16.mxu0 0
    %145 = vmatpush1.bf16.msra.mxu0 0
    %146 = vmatprep.subr.bf16.mxu0 0
    %147 = vmatpush1.bf16.msra.mxu0 0
    %148 = vmatprep.subr.bf16.mxu0 0
    %149 = vmatpush1.bf16.msra.mxu0 0
    %150 = vmatprep.subr.bf16.mxu0 0
    %151 = vmatpush1.bf16.msra.mxu0 0
    %152 = vmatprep.subr.bf16.mxu0 0
    %153 = vmatpush1.bf16.msra.mxu0 0
    %154 = vmatprep.subr.bf16.mxu0 0
    %155 = vmatpush1.bf16.msra.mxu0 0
    %156 = vmatprep.mubr.bf16.mxu0 0
    %157 = vmatmul.mubr.bf16.gmra.mrb[0].mxu0 %v74
    %v158 = vpop.f32.mrb[0].mxu0
    %v159 = vadd.f32 0.0, %v158
    %v160 = vpop.f32.mrb[0].mxu0
    %v161 = vpop.f32.mrb[0].mxu0
    %v162 = vadd.f32 0.0, %v161
    %v163 = vpop.f32.mrb[0].mxu0
    %164 = vdwg.mxu0
    %v165 = vadd.f32 %v50, %v159
    %v166 = vadd.f32 %v51, %v162
    %167 = vst [vmem:[#allocation2] sm:$0xff] %v165
    %168 = vst [vmem:[#allocation2 + $0x8] sm:$0xff] %v166
    // Predicated region
    $region26: #{tpu_custom_call.1} parent=1 // pred_check
      %p169 = pneg %p44
    $region27: #{tpu_custom_call.1} parent=1 // pred_check_branch
      %171 = sbr.rel (%p169) target = $region29
    $region28: #{tpu_custom_call.1} parent=1 // pred_region
      %v172 = vld [vmem:[#allocation2] sm:$0xff]
      %v173 = vld [vmem:[#allocation2 + $0x8] sm:$0xff]
      %v174 = vld [vmem:[%s2] sm:$0x1]
      %v176 = vlaneseq
      %v177 = vshrl.u32 %v176, 7
      %v178 = vsub.s32 0, %v177
      %v179 = vrot.slane %v174, %v178
      %v181 = vadd.f32 %v172, %v179
      %v182 = vadd.f32 %v173, %v179
      %183 = vst [vmem:[#allocation8] sm:$0xff] %v181
      %184 = vst [vmem:[#allocation8 + $0x8] sm:$0xff] %v182
    $region29: #{tpu_custom_call.1} parent=1 // pred_fallthru
      _
    // Predicated region
    $region30: #{tpu_custom_call.1} parent=1 // pred_check
      _
    $region31: #{tpu_custom_call.1} parent=1 // pred_check_branch
      %186 = sbr.rel (0) target = $region33
    $region32: #{tpu_custom_call.1} parent=1 // pred_region
      %s188 = ssub.s32 256, 256
      %189 = vsyncadd [#allocation5], %s188
      %s190 = sshll.u32 [#allocation8], 4
      %s191 = int_to_ptr.vmem [resolvable:$true] %s190
      %196 = dma.vmem_to_hbm [thread:$0]  %s191, 256, %s3, [#allocation5], 128, 128, 8
    $region33: #{tpu_custom_call.1} parent=1 // pred_fallthru
      _
    // Predicated region
    $region34: #{tpu_custom_call.1} parent=1 // pred_check
      _
    $region35: #{tpu_custom_call.1} parent=1 // pred_check_branch
      %198 = sbr.rel (0) target = $region37
    $region36: #{tpu_custom_call.1} parent=1 // pred_region
      %199 = dma.done [#allocation5], 256
    $region37: #{tpu_custom_call.1} parent=1 // pred_fallthru
      _
    %200 = vsyncpa [#allocation4], 1
    %201 = vsyncpa [#allocation7], 1
    %202 = vsyncpa [#allocation5], 1

</llo_original>
